<compile_context>
chip_gen: v6e
topology: v6e:2x2x1
jax: 0.10.0
libtpu: 0.0.40
codegen_flags: <defaults>
</compile_context>

<pallas_src>
import functools

import jax
import jax.numpy as jnp
from jax.experimental import pallas as pl
from jax.experimental.pallas import tpu as pltpu


# ----------------------- glue: bilinear resize (align_corners=True) -----------------
def _resize_matrix(out_size: int, in_size: int) -> jnp.ndarray:
    """1-D interpolation matrix matching F.interpolate(bilinear, align_corners=True)."""
    if out_size == 1:
        src = jnp.zeros((1,), jnp.float32)
    else:
        src = jnp.arange(out_size, dtype=jnp.float32) * (in_size - 1) / (out_size - 1)
    i0 = jnp.clip(jnp.floor(src).astype(jnp.int32), 0, in_size - 1)
    i1 = jnp.clip(i0 + 1, 0, in_size - 1)
    w1 = src - i0.astype(jnp.float32)
    w0 = 1.0 - w1
    rows = jnp.arange(out_size)
    R = jnp.zeros((out_size, in_size), jnp.float32)
    R = R.at[rows, i0].add(w0)
    R = R.at[rows, i1].add(w1)
    return R


def _bilinear_resize_nchw(x, H, W):
    if x.shape[2] == H and x.shape[3] == W:            # identity short-circuit
        return x.astype(jnp.float32)
    Ry = _resize_matrix(H, x.shape[2])
    Rx = _resize_matrix(W, x.shape[3])
    return jnp.einsum("ih,jw,bchw->bcij", Ry, Rx, x.astype(jnp.float32))


# ----------------------------- Pallas kernel ---------------------------------------
def _warp_mse_kernel(grid_ref, flow_ref, frm_ref, m0_ref, out_ref, *, H, W, C, TP):
    """One (batch b, pixel-tile t) step: warp TP output pixels via the separable
    bilinear-sampling factorization and emit per-lane squared-error partial sums."""
    flow = flow_ref[0]                                  # (2, TP) f32
    g = grid_ref[...]                                   # (2, TP) f32  [x; y] pixel grid
    fx, fy = flow[0:1, :], flow[1:2, :]
    xx, yy = g[0:1, :], g[1:2, :]

    # module normalization + grid_sample(align_corners=True) unnormalization
    ix = ((fx + xx) * (2.0 / W) - 1.0 + 1.0) * 0.5 * (W - 1)        # (1, TP)
    iy = ((fy + yy) * (2.0 / H) - 1.0 + 1.0) * 0.5 * (H - 1)

    x0f = jnp.floor(ix)
    y0f = jnp.floor(iy)
    wx1 = ix - x0f
    wx0 = 1.0 - wx1
    wy1 = iy - y0f
    wy0 = 1.0 - wy1
    ix0 = x0f.astype(jnp.int32)
    iy0 = y0f.astype(jnp.int32)

    # per-axis corner validity (padding_mode='zeros') folded into the weights; the
    # 4-corner weight factorizes exactly as (wx*vx) * (wy*vy).
    ax0 = jnp.where((ix0 >= 0) & (ix0 <= W - 1), wx0, 0.0)
    ax1 = jnp.where((ix0 >= -1) & (ix0 <= W - 2), wx1, 0.0)
    ay0 = jnp.where((iy0 >= 0) & (iy0 <= H - 1), wy0, 0.0)
    ay1 = jnp.where((iy0 >= -1) & (iy0 <= H - 2), wy1, 0.0)

    # x one-hot Rx (W, TP) and y weight map Ry (H, TP): O((H+W)*TP) VPU work only.
    cols_x = jax.lax.broadcasted_iota(jnp.int32, (W, TP), 0)
    rx = jnp.where(cols_x == ix0, ax0, 0.0) + jnp.where(cols_x == ix0 + 1, ax1, 0.0)
    rows_y = jax.lax.broadcasted_iota(jnp.int32, (H, TP), 0)
    ry = jnp.where(rows_y == iy0, ay0, 0.0) + jnp.where(rows_y == iy0 + 1, ay1, 0.0)

    # MXU: (C*H, W) @ (W, TP) -> (C*H, TP); bf16 operands, f32 accumulate.
    t1 = jnp.dot(frm_ref[0], rx.astype(jnp.bfloat16),
                 preferred_element_type=jnp.float32)

    # f32 VPU contraction over H with the y-weights -> warped (C, TP).
    warped = jnp.sum(t1.reshape(C, H, TP) * ry[None, :, :], axis=1)

    diff = warped - m0_ref[0]                           # (C, TP) f32
    # per-lane partial sums (reduce over channels only); aligned, unmasked store.
    out_ref[0, 0] = jnp.sum(diff * diff, axis=0, keepdims=True)


# ----------------------------- tile selection --------------------------------------
def _step_vmem_bytes(tp, C, H, W):
    """Approximate live bytes for one grid step (pipelined blocks + kernel temps)."""
    CH = C * H
    return (2 * (2 * tp * 4)          # flow block (double-buffered)
            + 2 * (2 * tp * 4)        # pixel-grid block
            + 2 * (C * tp * 4)        # masks0 block
            + 2 * (tp * 4)            # partial-sum output block
            + 2 * (CH * W * 2)        # frm block (bf16, resident across tiles)
            + tp * 4 * (W + H)        # Rx(f32) + Ry(f32)
            + tp * 2 * W              # Rx bf16 copy
            + tp * 4 * CH             # MXU result (C*H, TP) f32
            + tp * 4 * (3 * C + 16))  # warped / diff / sq + misc vreg-sized temps


def _pick_tile_pix(HW, C, H, W, budget_bytes=8 * 1024 * 1024):
    """Largest 128-multiple pixel tile whose per-step footprint fits the budget."""
    hw128 = -(-HW // 128) * 128
    tp = 4096
    while tp > 128 and _step_vmem_bytes(tp, C, H, W) > budget_bytes:
        tp //= 2
    return min(tp, hw128)


# ----------------------------- wrapper ---------------------------------------------
def joint_consist_loss(masks0, masks1, flow, tile_pix=None):
    """masks0: (B,C,H,W), masks1: (B,C,H1,W1), flow: (B,2,H,W)  (NCHW, like PyTorch)."""
    B, C, H, W = masks0.shape
    assert flow.shape == (B, 2, H, W)
    HW = H * W

    # F.interpolate(masks1, (H, W), bilinear, align_corners=True) -- plain-JAX glue
    frm = _bilinear_resize_nchw(masks1, H, W)                        # (B, C, H, W) f32

    if tile_pix is None:
        tile_pix = _pick_tile_pix(HW, C, H, W)
    assert tile_pix % 128 == 0
    HW_pad = -(-HW // tile_pix) * tile_pix
    T = HW_pad // tile_pix
    pad = HW_pad - HW

    # kernel layouts: free reshapes of NCHW (no HBM transposes), lane-dense last dims
    frm_k = frm.reshape(B, C * H, W).astype(jnp.bfloat16)            # (B, C*H, W)
    flow_k = flow.astype(jnp.float32).reshape(B, 2, HW)              # (B, 2, HW)
    m0_k = masks0.astype(jnp.float32).reshape(B, C, HW)              # (B, C, HW)

    # base pixel grid (x, y), flattened row-major.  Padded pixels get a far-OOB
    # sentinel so every bilinear corner is invalid -> warped == 0 there, and masks0's
    # zero padding makes those lanes contribute exactly 0 to the sum.
    xg = jnp.tile(jnp.arange(W, dtype=jnp.float32)[None, :], (H, 1)).reshape(-1)
    yg = jnp.tile(jnp.arange(H, dtype=jnp.float32)[:, None], (1, W)).reshape(-1)
    grid_k = jnp.stack([xg, yg], axis=0)                             # (2, HW)
    if pad:
        flow_k = jnp.pad(flow_k, ((0, 0), (0, 0), (0, pad)))
        m0_k = jnp.pad(m0_k, ((0, 0), (0, 0), (0, pad)))
        grid_k = jnp.pad(grid_k, ((0, 0), (0, pad)), constant_values=-1.0e4)

    # chip-aware VMEM limit from the real live set (v7x has only 64 MiB/TC).
    est = _step_vmem_bytes(tile_pix, C, H, W)
    try:
        cap = int(getattr(pltpu.get_tpu_info(), "vmem_capacity_bytes",
                          64 * 1024 * 1024))
    except Exception:  # pragma: no cover - conservative fallback
        cap = 64 * 1024 * 1024
    vmem_limit = int(min(int(0.85 * cap), max(32 * 1024 * 1024, 3 * est)))

    grid_spec = pltpu.PrefetchScalarGridSpec(
        num_scalar_prefetch=0,
        grid=(B, T),                     # tile axis innermost -> frm stays resident
        in_specs=[
            pl.BlockSpec((2, tile_pix), lambda b, t: (0, t)),          # pixel grid
            pl.BlockSpec((1, 2, tile_pix), lambda b, t: (b, 0, t)),    # flow
            pl.BlockSpec((1, C * H, W), lambda b, t: (b, 0, 0)),       # frm (per batch)
            pl.BlockSpec((1, C, tile_pix), lambda b, t: (b, 0, t)),    # masks0
        ],
        out_specs=pl.BlockSpec((1, 1, 1, tile_pix), lambda b, t: (b, t, 0, 0)),
    )

    partials = pl.pallas_call(
        functools.partial(_warp_mse_kernel, H=H, W=W, C=C, TP=tile_pix),
        out_shape=jax.ShapeDtypeStruct((B, T, 1, tile_pix), jnp.float32),
        grid_spec=grid_spec,
        compiler_params=pltpu.CompilerParams(
            dimension_semantics=("parallel", "arbitrary"),
            vmem_limit_bytes=vmem_limit),
    )(grid_k, flow_k, frm_k, m0_k)

    return jnp.sum(partials) / (B * C * H * W)


# ----------------------------- pure-JAX reference (for self-check) -----------------
def _ref_forward(masks0, masks1, flow):
    B, C, H, W = masks0.shape
    frm = _bilinear_resize_nchw(masks1, H, W)
    fx = flow[:, 0]
    fy = flow[:, 1]
    xx = jnp.arange(W, dtype=jnp.float32)[None, None, :]
    yy = jnp.arange(H, dtype=jnp.float32)[None, :, None]
    ix = ((fx + xx) * (2.0 / W) - 1.0 + 1.0) * 0.5 * (W - 1)
    iy = ((fy + yy) * (2.0 / H) - 1.0 + 1.0) * 0.5 * (H - 1)
    x0 = jnp.floor(ix)
    x1 = x0 + 1
    y0 = jnp.floor(iy)
    y1 = y0 + 1
    bidx = jnp.arange(B)[:, None, None, None]
    cidx = jnp.arange(C)[None, :, None, None]

    def gather(xc, yc):
        valid = (xc >= 0) & (xc <= W - 1) & (yc >= 0) & (yc <= H - 1)
        xi = jnp.clip(xc, 0, W - 1).astype(jnp.int32)
        yi = jnp.clip(yc, 0, H - 1).astype(jnp.int32)
        v = frm[bidx, cidx, yi[:, None], xi[:, None]]
        return v * valid[:, None].astype(frm.dtype)

    wx1 = ix - x0
    wx0 = 1 - wx1
    wy1 = iy - y0
    wy0 = 1 - wy1
    warped = (gather(x0, y0) * (wx0 * wy0)[:, None]
              + gather(x1, y0) * (wx1 * wy0)[:, None]
              + gather(x0, y1) * (wx0 * wy1)[:, None]
              + gather(x1, y1) * (wx1 * wy1)[:, None])
    return jnp.mean((warped - masks0.astype(jnp.float32)) ** 2)


if __name__ == "__main__":
    k0, k1, k2, k3, k4, k5 = jax.random.split(jax.random.PRNGKey(0), 6)

    # Case 1: different masks1 resolution (exercises the bilinear-resize glue),
    # tile_pix forced to 128 so the pixel-tiling path (T=2) is exercised.
    B, C, H, W = 2, 4, 16, 16
    masks0 = jax.random.normal(k0, (B, C, H, W), jnp.float32)
    masks1 = jax.random.normal(k1, (B, C, 8, 8), jnp.float32)
    flow = jax.random.normal(k2, (B, 2, H, W), jnp.float32) * 3.0    # some OOB samples
    loss = jax.block_until_ready(joint_consist_loss(masks0, masks1, flow, tile_pix=128))
    ref = jax.block_until_ready(_ref_forward(masks0, masks1, flow))
    rel = abs(float(loss) - float(ref)) / max(1.0, abs(float(ref)))
    assert rel <= 2e-2, (float(loss), float(ref))

    # Case 2: same-size short-circuit + HW not a multiple of 128 (exercises the
    # OOB-sentinel pixel padding path).
    B2, C2, H2, W2 = 1, 3, 8, 12
    m0b = jax.random.normal(k3, (B2, C2, H2, W2), jnp.float32)
    m1b = jax.random.normal(k4, (B2, C2, H2, W2), jnp.float32)
    flb = jax.random.normal(k5, (B2, 2, H2, W2), jnp.float32) * 2.0
    loss2 = jax.block_until_ready(joint_consist_loss(m0b, m1b, flb))
    ref2 = jax.block_until_ready(_ref_forward(m0b, m1b, flb))
    rel2 = abs(float(loss2) - float(ref2)) / max(1.0, abs(float(ref2)))
    assert rel2 <= 2e-2, (float(loss2), float(ref2))

    print("KERNEL_OK")
</pallas_src>

<mosaic_0001>
module attributes {stable_mosaic.version = 11 : i64} {
  func.func @_warp_mse_kernel(%arg0: i32, %arg1: i32, %arg2: memref<2x128xf32, #tpu.memory_space<vmem>>, %arg3: memref<1x2x128xf32, #tpu.memory_space<vmem>>, %arg4: memref<1x64x16xbf16, #tpu.memory_space<vmem>>, %arg5: memref<1x4x128xf32, #tpu.memory_space<vmem>>, %arg6: memref<1x1x1x128xf32, #tpu.memory_space<vmem>>) attributes {dimension_semantics = [#tpu.dimension_semantics<parallel>, #tpu.dimension_semantics<arbitrary>], iteration_bounds = array<i64: 2, 2>, scalar_prefetch = 0 : i64, scratch_operands = 0 : i64, tpu.core_type = #tpu.core_type<tc>, window_params = [{transform_indices = @transform_0, window_bounds = array<i64: 2, 128>}, {transform_indices = @transform_1, window_bounds = array<i64: 1, 2, 128>}, {transform_indices = @transform_2, window_bounds = array<i64: 1, 64, 16>}, {transform_indices = @transform_3, window_bounds = array<i64: 1, 4, 128>}, {transform_indices = @transform_4, window_bounds = array<i64: 1, 1, 1, 128>}]} {
    %c0 = arith.constant 0 : index
    %c0_0 = arith.constant 0 : index
    %c0_1 = arith.constant 0 : index
    %0 = vector.load %arg3[%c0, %c0_0, %c0_1] : memref<1x2x128xf32, #tpu.memory_space<vmem>>, vector<1x2x128xf32>
    %1 = vector.shape_cast %0 : vector<1x2x128xf32> to vector<2x128xf32>
    %c0_2 = arith.constant 0 : index
    %c0_3 = arith.constant 0 : index
    %2 = vector.load %arg2[%c0_2, %c0_3] : memref<2x128xf32, #tpu.memory_space<vmem>>, vector<2x128xf32>
    %3 = vector.extract_strided_slice %1 {offsets = [0, 0], sizes = [1, 128], strides = [1, 1]} : vector<2x128xf32> to vector<1x128xf32>
    %4 = vector.extract_strided_slice %1 {offsets = [1, 0], sizes = [1, 128], strides = [1, 1]} : vector<2x128xf32> to vector<1x128xf32>
    %5 = vector.extract_strided_slice %2 {offsets = [0, 0], sizes = [1, 128], strides = [1, 1]} : vector<2x128xf32> to vector<1x128xf32>
    %6 = vector.extract_strided_slice %2 {offsets = [1, 0], sizes = [1, 128], strides = [1, 1]} : vector<2x128xf32> to vector<1x128xf32>
    %7 = arith.addf %3, %5 : vector<1x128xf32>
    %cst = arith.constant 1.250000e-01 : f32
    %8 = vector.broadcast %cst : f32 to vector<1x128xf32>
    %9 = arith.mulf %7, %8 : vector<1x128xf32>
    %cst_4 = arith.constant 1.000000e+00 : f32
    %10 = vector.broadcast %cst_4 : f32 to vector<1x128xf32>
    %11 = arith.subf %9, %10 : vector<1x128xf32>
    %cst_5 = arith.constant 1.000000e+00 : f32
    %12 = vector.broadcast %cst_5 : f32 to vector<1x128xf32>
    %13 = arith.addf %11, %12 : vector<1x128xf32>
    %cst_6 = arith.constant 5.000000e-01 : f32
    %14 = vector.broadcast %cst_6 : f32 to vector<1x128xf32>
    %15 = arith.mulf %13, %14 : vector<1x128xf32>
    %cst_7 = arith.constant 1.500000e+01 : f32
    %16 = vector.broadcast %cst_7 : f32 to vector<1x128xf32>
    %17 = arith.mulf %15, %16 : vector<1x128xf32>
    %18 = arith.addf %4, %6 : vector<1x128xf32>
    %cst_8 = arith.constant 1.250000e-01 : f32
    %19 = vector.broadcast %cst_8 : f32 to vector<1x128xf32>
    %20 = arith.mulf %18, %19 : vector<1x128xf32>
    %cst_9 = arith.constant 1.000000e+00 : f32
    %21 = vector.broadcast %cst_9 : f32 to vector<1x128xf32>
    %22 = arith.subf %20, %21 : vector<1x128xf32>
    %cst_10 = arith.constant 1.000000e+00 : f32
    %23 = vector.broadcast %cst_10 : f32 to vector<1x128xf32>
    %24 = arith.addf %22, %23 : vector<1x128xf32>
    %cst_11 = arith.constant 5.000000e-01 : f32
    %25 = vector.broadcast %cst_11 : f32 to vector<1x128xf32>
    %26 = arith.mulf %24, %25 : vector<1x128xf32>
    %cst_12 = arith.constant 1.500000e+01 : f32
    %27 = vector.broadcast %cst_12 : f32 to vector<1x128xf32>
    %28 = arith.mulf %26, %27 : vector<1x128xf32>
    %29 = math.floor %17 : vector<1x128xf32>
    %30 = math.floor %28 : vector<1x128xf32>
    %31 = arith.subf %17, %29 : vector<1x128xf32>
    %cst_13 = arith.constant 1.000000e+00 : f32
    %32 = vector.broadcast %cst_13 : f32 to vector<1x128xf32>
    %33 = arith.subf %32, %31 : vector<1x128xf32>
    %34 = arith.subf %28, %30 : vector<1x128xf32>
    %cst_14 = arith.constant 1.000000e+00 : f32
    %35 = vector.broadcast %cst_14 : f32 to vector<1x128xf32>
    %36 = arith.subf %35, %34 : vector<1x128xf32>
    %37 = arith.fptosi %29 : vector<1x128xf32> to vector<1x128xi32>
    %38 = arith.fptosi %30 : vector<1x128xf32> to vector<1x128xi32>
    %c0_i32 = arith.constant 0 : i32
    %39 = vector.broadcast %c0_i32 : i32 to vector<1x128xi32>
    %40 = arith.cmpi sge, %37, %39 : vector<1x128xi32>
    %c15_i32 = arith.constant 15 : i32
    %41 = vector.broadcast %c15_i32 : i32 to vector<1x128xi32>
    %42 = arith.cmpi sle, %37, %41 : vector<1x128xi32>
    %43 = arith.andi %40, %42 : vector<1x128xi1>
    %cst_15 = arith.constant 0.000000e+00 : f32
    %44 = vector.broadcast %cst_15 : f32 to vector<1x128xf32>
    %45 = arith.select %43, %33, %44 : vector<1x128xi1>, vector<1x128xf32>
    %c-1_i32 = arith.constant -1 : i32
    %46 = vector.broadcast %c-1_i32 : i32 to vector<1x128xi32>
    %47 = arith.cmpi sge, %37, %46 : vector<1x128xi32>
    %c14_i32 = arith.constant 14 : i32
    %48 = vector.broadcast %c14_i32 : i32 to vector<1x128xi32>
    %49 = arith.cmpi sle, %37, %48 : vector<1x128xi32>
    %50 = arith.andi %47, %49 : vector<1x128xi1>
    %cst_16 = arith.constant 0.000000e+00 : f32
    %51 = vector.broadcast %cst_16 : f32 to vector<1x128xf32>
    %52 = arith.select %50, %31, %51 : vector<1x128xi1>, vector<1x128xf32>
    %c0_i32_17 = arith.constant 0 : i32
    %53 = vector.broadcast %c0_i32_17 : i32 to vector<1x128xi32>
    %54 = arith.cmpi sge, %38, %53 : vector<1x128xi32>
    %c15_i32_18 = arith.constant 15 : i32
    %55 = vector.broadcast %c15_i32_18 : i32 to vector<1x128xi32>
    %56 = arith.cmpi sle, %38, %55 : vector<1x128xi32>
    %57 = arith.andi %54, %56 : vector<1x128xi1>
    %cst_19 = arith.constant 0.000000e+00 : f32
    %58 = vector.broadcast %cst_19 : f32 to vector<1x128xf32>
    %59 = arith.select %57, %36, %58 : vector<1x128xi1>, vector<1x128xf32>
    %c-1_i32_20 = arith.constant -1 : i32
    %60 = vector.broadcast %c-1_i32_20 : i32 to vector<1x128xi32>
    %61 = arith.cmpi sge, %38, %60 : vector<1x128xi32>
    %c14_i32_21 = arith.constant 14 : i32
    %62 = vector.broadcast %c14_i32_21 : i32 to vector<1x128xi32>
    %63 = arith.cmpi sle, %38, %62 : vector<1x128xi32>
    %64 = arith.andi %61, %63 : vector<1x128xi1>
    %cst_22 = arith.constant 0.000000e+00 : f32
    %65 = vector.broadcast %cst_22 : f32 to vector<1x128xf32>
    %66 = arith.select %64, %34, %65 : vector<1x128xi1>, vector<1x128xf32>
    %67 = tpu.iota {dimensions = array<i32: 0>} : vector<16x128xi32>
    %68 = vector.broadcast %37 : vector<1x128xi32> to vector<16x128xi32>
    %69 = arith.cmpi eq, %67, %68 : vector<16x128xi32>
    %cst_23 = arith.constant 0.000000e+00 : f32
    %70 = vector.shape_cast %45 : vector<1x128xf32> to vector<1x128xf32>
    %71 = vector.broadcast %70 : vector<1x128xf32> to vector<16x128xf32>
    %72 = vector.broadcast %cst_23 : f32 to vector<16x128xf32>
    %73 = arith.select %69, %71, %72 : vector<16x128xi1>, vector<16x128xf32>
    %c1_i32 = arith.constant 1 : i32
    %74 = vector.broadcast %c1_i32 : i32 to vector<1x128xi32>
    %75 = arith.addi %37, %74 : vector<1x128xi32>
    %76 = vector.broadcast %75 : vector<1x128xi32> to vector<16x128xi32>
    %77 = arith.cmpi eq, %67, %76 : vector<16x128xi32>
    %cst_24 = arith.constant 0.000000e+00 : f32
    %78 = vector.shape_cast %52 : vector<1x128xf32> to vector<1x128xf32>
    %79 = vector.broadcast %78 : vector<1x128xf32> to vector<16x128xf32>
    %80 = vector.broadcast %cst_24 : f32 to vector<16x128xf32>
    %81 = arith.select %77, %79, %80 : vector<16x128xi1>, vector<16x128xf32>
    %82 = arith.addf %73, %81 : vector<16x128xf32>
    %83 = tpu.iota {dimensions = array<i32: 0>} : vector<16x128xi32>
    %84 = vector.broadcast %38 : vector<1x128xi32> to vector<16x128xi32>
    %85 = arith.cmpi eq, %83, %84 : vector<16x128xi32>
    %cst_25 = arith.constant 0.000000e+00 : f32
    %86 = vector.shape_cast %59 : vector<1x128xf32> to vector<1x128xf32>
    %87 = vector.broadcast %86 : vector<1x128xf32> to vector<16x128xf32>
    %88 = vector.broadcast %cst_25 : f32 to vector<16x128xf32>
    %89 = arith.select %85, %87, %88 : vector<16x128xi1>, vector<16x128xf32>
    %c1_i32_26 = arith.constant 1 : i32
    %90 = vector.broadcast %c1_i32_26 : i32 to vector<1x128xi32>
    %91 = arith.addi %38, %90 : vector<1x128xi32>
    %92 = vector.broadcast %91 : vector<1x128xi32> to vector<16x128xi32>
    %93 = arith.cmpi eq, %83, %92 : vector<16x128xi32>
    %cst_27 = arith.constant 0.000000e+00 : f32
    %94 = vector.shape_cast %66 : vector<1x128xf32> to vector<1x128xf32>
    %95 = vector.broadcast %94 : vector<1x128xf32> to vector<16x128xf32>
    %96 = vector.broadcast %cst_27 : f32 to vector<16x128xf32>
    %97 = arith.select %93, %95, %96 : vector<16x128xi1>, vector<16x128xf32>
    %98 = arith.addf %89, %97 : vector<16x128xf32>
    %c0_28 = arith.constant 0 : index
    %c0_29 = arith.constant 0 : index
    %c0_30 = arith.constant 0 : index
    %99 = vector.load %arg4[%c0_28, %c0_29, %c0_30] : memref<1x64x16xbf16, #tpu.memory_space<vmem>>, vector<1x64x16xbf16>
    %100 = vector.shape_cast %99 : vector<1x64x16xbf16> to vector<64x16xbf16>
    %101 = arith.truncf %82 : vector<16x128xf32> to vector<16x128xbf16>
    %cst_31 = arith.constant dense<0.000000e+00> : vector<64x128xf32>
    %102 = tpu.matmul %100, %101, %cst_31 {dimension_numbers = #tpu.dot_dimension_numbers<[1], [0], [0], [1], [0, 0, 1, 1], [], []>} : vector<64x16xbf16>, vector<16x128xbf16>, vector<64x128xf32> -> vector<64x128xf32>
    %103 = vector.shape_cast %102 : vector<64x128xf32> to vector<4x16x128xf32>
    %104 = vector.shape_cast %98 : vector<16x128xf32> to vector<1x16x128xf32>
    %105 = vector.broadcast %104 : vector<1x16x128xf32> to vector<4x16x128xf32>
    %106 = arith.mulf %103, %105 : vector<4x16x128xf32>
    %cst_32 = arith.constant dense<0.000000e+00> : vector<4x128xf32>
    %107 = vector.multi_reduction <add>, %106, %cst_32 [1] : vector<4x16x128xf32> to vector<4x128xf32>
    %c0_33 = arith.constant 0 : index
    %c0_34 = arith.constant 0 : index
    %c0_35 = arith.constant 0 : index
    %108 = vector.load %arg5[%c0_33, %c0_34, %c0_35] : memref<1x4x128xf32, #tpu.memory_space<vmem>>, vector<1x4x128xf32>
    %109 = vector.shape_cast %108 : vector<1x4x128xf32> to vector<4x128xf32>
    %110 = arith.subf %107, %109 : vector<4x128xf32>
    %111 = arith.mulf %110, %110 : vector<4x128xf32>
    %cst_36 = arith.constant dense<0.000000e+00> : vector<128xf32>
    %112 = vector.multi_reduction <add>, %111, %cst_36 [0] : vector<4x128xf32> to vector<128xf32>
    %113 = vector.shape_cast %112 : vector<128xf32> to vector<1x128xf32>
    %c0_37 = arith.constant 0 : index
    %c0_38 = arith.constant 0 : index
    %c0_39 = arith.constant 0 : index
    %c0_40 = arith.constant 0 : index
    %114 = vector.load %arg6[%c0_37, %c0_38, %c0_39, %c0_40] : memref<1x1x1x128xf32, #tpu.memory_space<vmem>>, vector<1x1x1x128xf32>
    %115 = vector.shape_cast %114 : vector<1x1x1x128xf32> to vector<1x128xf32>
    %116 = vector.shape_cast %113 : vector<1x128xf32> to vector<1x1x1x128xf32>
    tpu.vector_store %arg6[%c0_37, %c0_38, %c0_39, %c0_40], %116 {strides = array<i32>} : memref<1x1x1x128xf32, #tpu.memory_space<vmem>>, vector<1x1x1x128xf32>,
    return
  }
  func.func @transform_0(%arg0: i32, %arg1: i32) -> (i32, i32) {
    %c0_i32 = arith.constant 0 : i32
    %c0_i32_0 = arith.constant 0 : i32
    return %c0_i32, %arg1 : i32, i32
  }
  func.func @transform_1(%arg0: i32, %arg1: i32) -> (i32, i32, i32) {
    %c0_i32 = arith.constant 0 : i32
    %c0_i32_0 = arith.constant 0 : i32
    return %arg0, %c0_i32, %arg1 : i32, i32, i32
  }
  func.func @transform_2(%arg0: i32, %arg1: i32) -> (i32, i32, i32) {
    %c0_i32 = arith.constant 0 : i32
    %c0_i32_0 = arith.constant 0 : i32
    %c0_i32_1 = arith.constant 0 : i32
    return %arg0, %c0_i32, %c0_i32_0 : i32, i32, i32
  }
  func.func @transform_3(%arg0: i32, %arg1: i32) -> (i32, i32, i32) {
    %c0_i32 = arith.constant 0 : i32
    %c0_i32_0 = arith.constant 0 : i32
    return %arg0, %c0_i32, %arg1 : i32, i32, i32
  }
  func.func @transform_4(%arg0: i32, %arg1: i32) -> (i32, i32, i32, i32) {
    %c0_i32 = arith.constant 0 : i32
    %c0_i32_0 = arith.constant 0 : i32
    %c0_i32_1 = arith.constant 0 : i32
    return %arg0, %arg1, %c0_i32, %c0_i32_0 : i32, i32, i32, i32
  }
}

</mosaic_0001>

<llo_original>
// kernel: tpu_custom_call.1
$region0: #{tpu_custom_call.1}
  #allocation0 [shape = 'u32[]', space=smem, size = 0x4, offset = 0x4, fixed_abs, tag = 'smem constant byte address 0x4 - core index']
  #allocation1 [shape = 'u32[144,128]{1,0:T(1,128)}', space=vmem, size = 0x12000, scoped, tag = 'internal scratch']
  %s0 = inlined_call_operand.vmem [shape: f32[2,256], index: 0, kind: input, shape index: {}]
  %s1 = inlined_call_operand.vmem [shape: f32[2,2,256], index: 1, kind: input, shape index: {}]
  %s2 = inlined_call_operand.vmem [shape: bf16[2,64,16], index: 2, kind: input, shape index: {}]
  %s3 = inlined_call_operand.vmem [shape: f32[2,4,256], index: 3, kind: input, shape index: {}]
  %s4 = inlined_call_operand.hbm [shape: f32[2,2,1,128], index: 4, kind: output, shape index: {}]
  %s5 = sld [smem:[#allocation0]]
  $region49: #{tpu_custom_call.1} parent=0
    _
  %s7 = ssub.s32 1, %s5
  %s8 = scalar_select 0, %s7, %s5
  $region1: #{tpu_custom_call.1} parent=0
    #allocation2 [shape = 'u8[1024]{0}', space=vmem, size = 0x400, scoped, tag = 'output window, operand 0']
    #allocation3 [shape = 's32[2]{0}', space=sflag, size = 0x8, scoped, tag = 'scoped memory for tpu_custom_call.1']
    %9 = vsyncpa [#allocation3], 0
    %s10 = scalar_lea.sflag [#allocation3], 1
    %11 = vsyncpa %s10, 0
    loop: start=0, step=1, limit=6
    $region2: #{tpu_custom_call.1} parent=1 // loop_pre_header
      _
    $region3: #{tpu_custom_call.1} parent=1 // loop_header
      %s13 = sphi 0, %s17
      %p14 = scmp.ge.s32.totalorder %s13, 6
      %s20 = sphi 0, %s32
      %s21 = sphi 0, %s28
      %s22 = sphi 0, %s20
      %s23 = sphi 0, %s21
      %s24 = sphi 0, %s22
      %s25 = sphi 0, %s23
      %s35 = sphi 0, %s37
      %s38 = sphi 0, %s35
      %s39 = sphi 0, %s38
      %s55 = sphi 0, %s39
      %s63 = sphi 0, %s65
      %s66 = sphi 0, %s63
      %s67 = sphi 0, %s66
      %s83 = sphi 0, %s67
      %s89 = sphi 0, %s91
      %s92 = sphi 0, %s89
      %s93 = sphi 0, %s92
      %s109 = sphi 0, %s93
      %s117 = sphi 0, %s119
      %s120 = sphi 0, %s117
      %s121 = sphi 0, %s120
      %s137 = sphi 0, %s121
      %s145 = sphi 0, %s147
      %s148 = sphi 0, %s145
      %s149 = sphi 0, %s148
      %s165 = sphi 0, %s149
    $region4: #{tpu_custom_call.1} parent=1 // loop_header_branch
      %16 = sbr.rel (%p14) target = $region8
    $region5: #{tpu_custom_call.1} parent=1 // loop_body
      %s18 = ssub.s32 %s13, 1
      %s19 = ssub.s32 %s13, 2
      %s26 = sadd.s32 1, %s21
      %p27 = scmp.ge.s32.totalorder %s26, 2
      %s28 = scalar_select %p27, 0, %s26
      %s29 = sadd.s32 1, %s20
      %s30 = scalar_select %p27, %s29, %s20
      %p31 = scmp.ge.s32.totalorder %s30, 2
      %s32 = scalar_select %p31, 0, %s30
      %s33 = ssub.s32 %s21, %s28
      %p34 = scmp.eq.s32.totalorder %s33, 0
      %s36 = sadd.s32 %s35, 1
      %s37 = scalar_select %p34, %s35, %s36
      %p40 = pneg %p34
      %p41 = scmp.eq.s32.totalorder %s13, 3
      %p42 = por %p40, %p41
      %p43 = scmp.ne.s32.totalorder %s35, %s38
      %p44 = scmp.eq.s32.totalorder %s13, 0
      %p45 = por %p43, %p44
      %p46 = scmp.ne.s32.totalorder %s35, %s38
      %p47 = scmp.eq.s32.totalorder %s18, 3
      %p48 = por %p46, %p47
      %p49 = scmp.ne.s32.totalorder %s38, %s39
      %p50 = scmp.eq.s32.totalorder %s18, 0
      %p51 = por %p49, %p50
      %p52 = scmp.ne.s32.totalorder %s38, %s39
      %p53 = scmp.eq.s32.totalorder %s19, 3
      %p54 = por %p52, %p53
      %p56 = scmp.ne.s32.totalorder %s39, %s55
      %p57 = scmp.eq.s32.totalorder %s19, 0
      %p58 = por %p56, %p57
      %s59 = ssub.s32 %s20, %s32
      %s60 = ssub.s32 %s21, %s28
      %s61 = sor.u32 %s59, %s60
      %p62 = scmp.eq.s32.totalorder %s61, 0
      %s64 = sadd.s32 %s63, 1
      %s65 = scalar_select %p62, %s63, %s64
      %p68 = pneg %p62
      %p69 = scmp.eq.s32.totalorder %s13, 3
      %p70 = por %p68, %p69
      %p71 = scmp.ne.s32.totalorder %s63, %s66
      %p72 = scmp.eq.s32.totalorder %s13, 0
      %p73 = por %p71, %p72
      %p74 = scmp.ne.s32.totalorder %s63, %s66
      %p75 = scmp.eq.s32.totalorder %s18, 3
      %p76 = por %p74, %p75
      %p77 = scmp.ne.s32.totalorder %s66, %s67
      %p78 = scmp.eq.s32.totalorder %s18, 0
      %p79 = por %p77, %p78
      %p80 = scmp.ne.s32.totalorder %s66, %s67
      %p81 = scmp.eq.s32.totalorder %s19, 3
      %p82 = por %p80, %p81
      %p84 = scmp.ne.s32.totalorder %s67, %s83
      %p85 = scmp.eq.s32.totalorder %s19, 0
      %p86 = por %p84, %p85
      %s87 = ssub.s32 %s20, %s32
      %p88 = scmp.eq.s32.totalorder %s87, 0
      %s90 = sadd.s32 %s89, 1
      %s91 = scalar_select %p88, %s89, %s90
      %p94 = pneg %p88
      %p95 = scmp.eq.s32.totalorder %s13, 3
      %p96 = por %p94, %p95
      %p97 = scmp.ne.s32.totalorder %s89, %s92
      %p98 = scmp.eq.s32.totalorder %s13, 0
      %p99 = por %p97, %p98
      %p100 = scmp.ne.s32.totalorder %s89, %s92
      %p101 = scmp.eq.s32.totalorder %s18, 3
      %p102 = por %p100, %p101
      %p103 = scmp.ne.s32.totalorder %s92, %s93
      %p104 = scmp.eq.s32.totalorder %s18, 0
      %p105 = por %p103, %p104
      %p106 = scmp.ne.s32.totalorder %s92, %s93
      %p107 = scmp.eq.s32.totalorder %s19, 3
      %p108 = por %p106, %p107
      %p110 = scmp.ne.s32.totalorder %s93, %s109
      %p111 = scmp.eq.s32.totalorder %s19, 0
      %p112 = por %p110, %p111
      %s113 = ssub.s32 %s20, %s32
      %s114 = ssub.s32 %s21, %s28
      %s115 = sor.u32 %s113, %s114
      %p116 = scmp.eq.s32.totalorder %s115, 0
      %s118 = sadd.s32 %s117, 1
      %s119 = scalar_select %p116, %s117, %s118
      %p122 = pneg %p116
      %p123 = scmp.eq.s32.totalorder %s13, 3
      %p124 = por %p122, %p123
      %p125 = scmp.ne.s32.totalorder %s117, %s120
      %p126 = scmp.eq.s32.totalorder %s13, 0
      %p127 = por %p125, %p126
      %p128 = scmp.ne.s32.totalorder %s117, %s120
      %p129 = scmp.eq.s32.totalorder %s18, 3
      %p130 = por %p128, %p129
      %p131 = scmp.ne.s32.totalorder %s120, %s121
      %p132 = scmp.eq.s32.totalorder %s18, 0
      %p133 = por %p131, %p132
      %p134 = scmp.ne.s32.totalorder %s120, %s121
      %p135 = scmp.eq.s32.totalorder %s19, 3
      %p136 = por %p134, %p135
      %p138 = scmp.ne.s32.totalorder %s121, %s137
      %p139 = scmp.eq.s32.totalorder %s19, 0
      %p140 = por %p138, %p139
      %s141 = ssub.s32 %s20, %s32
      %s142 = ssub.s32 %s21, %s28
      %s143 = sor.u32 %s141, %s142
      %p144 = scmp.eq.s32.totalorder %s143, 0
      %s146 = sadd.s32 %s145, 1
      %s147 = scalar_select %p144, %s145, %s146
      %p150 = pneg %p144
      %p151 = scmp.eq.s32.totalorder %s13, 3
      %p152 = por %p150, %p151
      %p153 = scmp.ne.s32.totalorder %s145, %s148
      %p154 = scmp.eq.s32.totalorder %s13, 0
      %p155 = por %p153, %p154
      %p156 = scmp.ne.s32.totalorder %s145, %s148
      %p157 = scmp.eq.s32.totalorder %s18, 3
      %p158 = por %p156, %p157
      %p159 = scmp.ne.s32.totalorder %s148, %s149
      %p160 = scmp.eq.s32.totalorder %s18, 0
      %p161 = por %p159, %p160
      %p162 = scmp.ne.s32.totalorder %s148, %s149
      %p163 = scmp.eq.s32.totalorder %s19, 3
      %p164 = por %p162, %p163
      %p166 = scmp.ne.s32.totalorder %s149, %s165
      %p167 = scmp.eq.s32.totalorder %s19, 0
      %p168 = por %p166, %p167
      %p169 = scmp.le.s32.totalorder 1, %s13
      %p170 = scmp.lt.s32.totalorder %s13, 5
      %p171 = pnand %p169, %p170
      %p172 = pneg %p171
      // Predicated region
      $region9: #{tpu_custom_call.1} parent=5 // pred_check
        _
      $region10: #{tpu_custom_call.1} parent=5 // pred_check_branch
        %174 = sbr.rel (%p171) target = $region12
      $region11: #{tpu_custom_call.1} parent=5 // pred_region
        %s175 = ssub.s32 %s13, 1
      $region12: #{tpu_custom_call.1} parent=5 // pred_fallthru
        _
      %p176 = scmp.lt.s32.totalorder %s13, 4
      // Predicated region
      $region13: #{tpu_custom_call.1} parent=5 // pred_check
        %p177 = pneg %p176
      $region14: #{tpu_custom_call.1} parent=5 // pred_check_branch
        %179 = sbr.rel (%p177) target = $region16
      $region15: #{tpu_custom_call.1} parent=5 // pred_region
        // Predicated region
        $region17: #{tpu_custom_call.1} parent=15 // pred_check
          %p180 = pneg %p45
        $region18: #{tpu_custom_call.1} parent=15 // pred_check_branch
          %182 = sbr.rel (%p180) target = $region20
        $region19: #{tpu_custom_call.1} parent=15 // pred_region
          %p183 = scmp.lt.s32.totalorder %s21, 1
          %s184 = scalar_select %p183, %s21, 1
          %s185 = smul.addr %s184, 2
          %s186 = scalar_lea.vmem %s0, %s185
        $region20: #{tpu_custom_call.1} parent=15 // pred_fallthru
          _
        // Predicated region
        $region21: #{tpu_custom_call.1} parent=15 // pred_check
          %p187 = pneg %p73
        $region22: #{tpu_custom_call.1} parent=15 // pred_check_branch
          %189 = sbr.rel (%p187) target = $region24
        $region23: #{tpu_custom_call.1} parent=15 // pred_region
          %p190 = scmp.lt.s32.totalorder %s20, 1
          %s191 = scalar_select %p190, %s20, 1
          %p192 = scmp.lt.s32.totalorder %s21, 1
          %s193 = scalar_select %p192, %s21, 1
          %s194 = smul.addr %s191, 2
          %s195 = sadd.s32 %s193, %s194
          %s196 = smul.addr %s195, 2
          %s197 = scalar_lea.vmem %s1, %s196
        $region24: #{tpu_custom_call.1} parent=15 // pred_fallthru
          _
        // Predicated region
        $region25: #{tpu_custom_call.1} parent=15 // pred_check
          %p198 = pneg %p99
        $region26: #{tpu_custom_call.1} parent=15 // pred_check_branch
          %200 = sbr.rel (%p198) target = $region28
        $region27: #{tpu_custom_call.1} parent=15 // pred_region
          %p201 = scmp.lt.s32.totalorder %s20, 1
          %s202 = scalar_select %p201, %s20, 1
          %s203 = smul.addr %s202, 8
          %s204 = smul.addr %s203, 4
          %s205 = scalar_lea.vmem %s2, %s204
        $region28: #{tpu_custom_call.1} parent=15 // pred_fallthru
          _
        // Predicated region
        $region29: #{tpu_custom_call.1} parent=15 // pred_check
          %p206 = pneg %p127
        $region30: #{tpu_custom_call.1} parent=15 // pred_check_branch
          %208 = sbr.rel (%p206) target = $region32
        $region31: #{tpu_custom_call.1} parent=15 // pred_region
          %p209 = scmp.lt.s32.totalorder %s20, 1
          %s210 = scalar_select %p209, %s20, 1
          %p211 = scmp.lt.s32.totalorder %s21, 1
          %s212 = scalar_select %p211, %s21, 1
          %s213 = smul.addr %s210, 2
          %s214 = sadd.s32 %s212, %s213
          %s215 = smul.addr %s214, 4
          %s216 = scalar_lea.vmem %s3, %s215
        $region32: #{tpu_custom_call.1} parent=15 // pred_fallthru
          _
      $region16: #{tpu_custom_call.1} parent=5 // pred_fallthru
        _
      %p217 = scmp.le.s32.totalorder 1, %s13
      %p218 = scmp.lt.s32.totalorder %s13, 5
      %p219 = pnand %p217, %p218
      %p220 = pneg %p219
      // Predicated region
      $region33: #{tpu_custom_call.1} parent=5 // pred_check
        _
      $region34: #{tpu_custom_call.1} parent=5 // pred_check_branch
        %222 = sbr.rel (%p219) target = $region36
      $region35: #{tpu_custom_call.1} parent=5 // pred_region
        %s223 = ssub.s32 %s13, 1
        %p224 = scmp.lt.s32.totalorder %s23, 1
        %s225 = scalar_select %p224, %s23, 1
        %s226 = smul.addr %s225, 2
        %s227 = scalar_lea.vmem %s0, %s226
        %p228 = pneg %p51
        %p229 = pneg %p48
        %p230 = scmp.lt.s32.totalorder %s22, 1
        %s231 = scalar_select %p230, %s22, 1
        %p232 = scmp.lt.s32.totalorder %s23, 1
        %s233 = scalar_select %p232, %s23, 1
        %s234 = smul.addr %s231, 2
        %s235 = sadd.s32 %s233, %s234
        %s236 = smul.addr %s235, 2
        %s237 = scalar_lea.vmem %s1, %s236
        %p238 = pneg %p79
        %p239 = pneg %p76
        %p240 = scmp.lt.s32.totalorder %s22, 1
        %s241 = scalar_select %p240, %s22, 1
        %s242 = smul.addr %s241, 8
        %s243 = smul.addr %s242, 4
        %s244 = scalar_lea.vmem %s2, %s243
        %p245 = pneg %p105
        %p246 = pneg %p102
        %p247 = scmp.lt.s32.totalorder %s22, 1
        %s248 = scalar_select %p247, %s22, 1
        %p249 = scmp.lt.s32.totalorder %s23, 1
        %s250 = scalar_select %p249, %s23, 1
        %s251 = smul.addr %s248, 2
        %s252 = sadd.s32 %s250, %s251
        %s253 = smul.addr %s252, 4
        %s254 = scalar_lea.vmem %s3, %s253
        %p255 = pneg %p133
        %p256 = pneg %p130
        %p257 = pneg %p161
        %p258 = pneg %p158
        %s259 = sand.u32 %s148, 1
        %s260 = scalar_lea.sflag [#allocation3], %s259
        %s261 = sand.u32 %s148, 1
        %s262 = scalar_lea.vmem [#allocation2], %s261
        %p263 = scmp.lt.s32.totalorder %s23, 1
        %s264 = scalar_select %p263, %s23, 1
        %s265 = smul.addr %s264, 2
        %s266 = scalar_lea.vmem %s0, %s265
        %p267 = scmp.lt.s32.totalorder %s22, 1
        %s268 = scalar_select %p267, %s22, 1
        %p269 = scmp.lt.s32.totalorder %s23, 1
        %s270 = scalar_select %p269, %s23, 1
        %s271 = smul.addr %s268, 2
        %s272 = sadd.s32 %s270, %s271
        %s273 = smul.addr %s272, 2
        %s274 = scalar_lea.vmem %s1, %s273
        %p275 = scmp.lt.s32.totalorder %s22, 1
        %s276 = scalar_select %p275, %s22, 1
        %s277 = smul.addr %s276, 8
        %s278 = smul.addr %s277, 4
        %s279 = scalar_lea.vmem %s2, %s278
        %p280 = scmp.lt.s32.totalorder %s22, 1
        %s281 = scalar_select %p280, %s22, 1
        %p282 = scmp.lt.s32.totalorder %s23, 1
        %s283 = scalar_select %p282, %s23, 1
        %s284 = smul.addr %s281, 2
        %s285 = sadd.s32 %s283, %s284
        %s286 = smul.addr %s285, 4
        %s287 = scalar_lea.vmem %s3, %s286
        %v289 = vld [vmem:[%s274] sm:$0x3]
        %v290 = vld [vmem:[%s266] sm:$0x3]
        %v291 = vadd.f32 %v289, %v290
        %v292 = vmul.f32 %v291, 0.125
        %v293 = vsub.f32 %v292, 1.0
        %v294 = vadd.f32 %v293, 1.0
        %v295 = vmul.f32 %v294, 0.5
        %v296 = vmul.f32 %v295, 15.0
        %v297 = vfloor.f32 %v296
        %v298 = vsub.f32 %v296, %v297
        %v299 = vsub.f32 1.0, %v298
        %v300 = vcvt.f32.s32.to.zero.pseudo %v297
        %vm301 = vcmp.ge.s32.totalorder %v300, 0
        %vm302 = vcmp.le.s32.totalorder %v300, 15
        %vm303 = vmand %vm301, %vm302
        %v304 = vsel %vm303, %v299, 0.0
        %vm305 = vcmp.ge.s32.totalorder %v300, 4294967295
        %vm306 = vcmp.le.s32.totalorder %v300, 14
        %vm307 = vmand %vm305, %vm306
        %v308 = vsel %vm307, %v298, 0.0
        %v309 = vlaneseq
        %v310 = vshrl.u32 %v309, 7
        %v311 = vadd.s32 %v310, 8
        %v312 = vlaneseq
        %v313 = vshrl.u32 %v312, 7
        %v314 = vsub.s32 0, %v313
        %v315 = vrot.slane %v300, %v314
        %vm316 = vcmp.eq.s32.totalorder %v310, %v315
        %vm317 = vcmp.eq.s32.totalorder %v311, %v315
        %v318 = vlaneseq
        %v319 = vshrl.u32 %v318, 7
        %v320 = vsub.s32 0, %v319
        %v321 = vrot.slane %v304, %v320
        %v322 = vsel %vm316, %v321, 0.0
        %v323 = vsel %vm317, %v321, 0.0
        %v324 = vadd.s32 %v300, 1
        %v325 = vlaneseq
        %v326 = vshrl.u32 %v325, 7
        %v327 = vsub.s32 0, %v326
        %v328 = vrot.slane %v324, %v327
        %vm329 = vcmp.eq.s32.totalorder %v310, %v328
        %vm330 = vcmp.eq.s32.totalorder %v311, %v328
        %v331 = vlaneseq
        %v332 = vshrl.u32 %v331, 7
        %v333 = vsub.s32 0, %v332
        %v334 = vrot.slane %v308, %v333
        %v335 = vsel %vm329, %v334, 0.0
        %v336 = vsel %vm330, %v334, 0.0
        %v337 = vadd.f32 %v322, %v335
        %v338 = vadd.f32 %v323, %v336
        %v339 = vlaneseq
        %v340 = vshrl.u32 %v339, 7
        %v341 = vsub.s32 1, %v340
        %v342 = vrot.slane %v300, %v341
        %vm343 = vcmp.eq.s32.totalorder %v310, %v342
        %vm344 = vcmp.eq.s32.totalorder %v311, %v342
        %v345 = vlaneseq
        %v346 = vshrl.u32 %v345, 7
        %v347 = vsub.s32 1, %v346
        %v348 = vrot.slane %v304, %v347
        %v349 = vsel %vm343, %v348, 0.0
        %v350 = vsel %vm344, %v348, 0.0
        %v351 = vlaneseq
        %v352 = vshrl.u32 %v351, 7
        %v353 = vsub.s32 1, %v352
        %v354 = vrot.slane %v324, %v353
        %vm355 = vcmp.eq.s32.totalorder %v310, %v354
        %vm356 = vcmp.eq.s32.totalorder %v311, %v354
        %v357 = vlaneseq
        %v358 = vshrl.u32 %v357, 7
        %v359 = vsub.s32 1, %v358
        %v360 = vrot.slane %v308, %v359
        %v361 = vsel %vm355, %v360, 0.0
        %v362 = vsel %vm356, %v360, 0.0
        %v363 = vadd.f32 %v349, %v361
        %v364 = vadd.f32 %v350, %v362
        %v365 = vld [vmem:[%s279] sm:$0xf]
        %v366 = vld [vmem:[%s279 + $0x4] sm:$0xf]
        %v367 = vld [vmem:[%s279 + $0x8] sm:$0xf]
        %v368 = vld [vmem:[%s279 + $0xc] sm:$0xf]
        %v369 = vld [vmem:[%s279 + $0x10] sm:$0xf]
        %v370 = vld [vmem:[%s279 + $0x14] sm:$0xf]
        %v371 = vld [vmem:[%s279 + $0x18] sm:$0xf]
        %v372 = vld [vmem:[%s279 + $0x1c] sm:$0xf]
        %v373 = vpack.c.bf16 %v338, %v337
        %v382 = vunpack.c.l.b16 %v365
        %v383 = vunpack.c.l.b16 %v366
        %v384 = vunpack.c.l.b16 %v367
        %v385 = vunpack.c.l.b16 %v368
        %v386 = vunpack.c.l.b16 %v369
        %v387 = vunpack.c.l.b16 %v370
        %v388 = vunpack.c.l.b16 %v371
        %v389 = vunpack.c.l.b16 %v372
        %v390 = vpack.c.b16 %v383, %v382
        %v391 = vpack.c.b16 %v385, %v384
        %v392 = vpack.c.b16 %v387, %v386
        %v393 = vpack.c.b16 %v389, %v388
        %vm394 = vcmask 130048
        %v396 = vsel %vm394, %v390, 0
        %v399 = vsel %vm394, %v391, 0
        %v402 = vsel %vm394, %v392, 0
        %v405 = vsel %vm394, %v393, 0
        %407 = vmatprep.subr.bf16.mxu0 0
        %408 = vmatpush1.bf16.msra.mxu0 0
        %409 = vmatprep.subr.bf16.mxu0 0
        %410 = vmatpush1.bf16.msra.mxu0 0
        %411 = vmatprep.subr.bf16.mxu0 0
        %412 = vmatpush1.bf16.msra.mxu0 0
        %413 = vmatprep.subr.bf16.mxu0 0
        %414 = vmatpush1.bf16.msra.mxu0 0
        %415 = vmatprep.subr.bf16.mxu0 0
        %416 = vmatpush1.bf16.msra.mxu0 0
        %417 = vmatprep.subr.bf16.mxu0 0
        %418 = vmatpush1.bf16.msra.mxu0 0
        %419 = vmatprep.subr.bf16.mxu0 0
        %420 = vmatpush1.bf16.msra.mxu0 0
        %421 = vmatprep.subr.bf16.mxu0 0
        %422 = vmatpush1.bf16.msra.mxu0 %v373
        %423 = vmatprep.subr.bf16.mxu0 0
        %424 = vmatpush2.bf16.msra.mxu0 0
        %425 = vmatprep.subr.bf16.mxu0 0
        %426 = vmatpush2.bf16.msra.mxu0 0
        %427 = vmatprep.subr.bf16.mxu0 0
        %428 = vmatpush2.bf16.msra.mxu0 0
        %429 = vmatprep.subr.bf16.mxu0 0
        %430 = vmatpush2.bf16.msra.mxu0 0
        %431 = vmatprep.subr.bf16.mxu0 0
        %432 = vmatpush2.bf16.msra.mxu0 0
        %433 = vmatprep.subr.bf16.mxu0 0
        %434 = vmatpush2.bf16.msra.mxu0 0
        %435 = vmatprep.subr.bf16.mxu0 0
        %436 = vmatpush2.bf16.msra.mxu0 0
        %437 = vmatprep.subr.bf16.mxu0 0
        %438 = vmatpush2.bf16.msra.mxu0 0
        %439 = vmatprep.mubr.bf16.mxu0 0
        %440 = vmatmul.mubr.bf16.gmra.mxu0 %v396
        %v441 = vpop.f32.mrf.mxu0
        %v442 = vadd.f32 0.0, %v441
        %v443 = vpop.f32.mrf.mxu0
        %v444 = vpop.f32.mrf.mxu0
        %v445 = vadd.f32 0.0, %v444
        %v446 = vpop.f32.mrf.mxu0
        %447 = vmatprep.mubr.bf16.mxu0 0
        %448 = vmatmul.mubr.bf16.gmra.mxu0 %v399
        %v449 = vpop.f32.mrf.mxu0
        %v450 = vadd.f32 0.0, %v449
        %v451 = vpop.f32.mrf.mxu0
        %v452 = vpop.f32.mrf.mxu0
        %v453 = vadd.f32 0.0, %v452
        %v454 = vpop.f32.mrf.mxu0
        %455 = vmatprep.mubr.bf16.mxu0 0
        %456 = vmatmul.mubr.bf16.gmra.mxu0 %v402
        %v457 = vpop.f32.mrf.mxu0
        %v458 = vadd.f32 0.0, %v457
        %v459 = vpop.f32.mrf.mxu0
        %v460 = vpop.f32.mrf.mxu0
        %v461 = vadd.f32 0.0, %v460
        %v462 = vpop.f32.mrf.mxu0
        %463 = vmatprep.mubr.bf16.mxu0 0
        %464 = vmatmul.mubr.bf16.gmra.mxu0 %v405
        %v465 = vpop.f32.mrf.mxu0
        %v466 = vadd.f32 0.0, %v465
        %v467 = vpop.f32.mrf.mxu0
        %v468 = vpop.f32.mrf.mxu0
        %v469 = vadd.f32 0.0, %v468
        %v470 = vpop.f32.mrf.mxu0
        %471 = vdwg.mxu0
        %v472 = vmul.f32 %v442, %v363
        %v473 = vmul.f32 %v445, %v364
        %v474 = vmul.f32 %v450, %v363
        %v475 = vmul.f32 %v453, %v364
        %v476 = vmul.f32 %v458, %v363
        %v477 = vmul.f32 %v461, %v364
        %v478 = vmul.f32 %v466, %v363
        %v479 = vmul.f32 %v469, %v364
        %v480 = vadd.f32 %v472, %v473
        %v481 = vrot.slane %v480, 4
        %v482 = vadd.f32 %v480, %v481
        %v483 = vrot.slane %v482, 2
        %v484 = vadd.f32 %v482, %v483
        %v485 = vrot.slane %v484, 1
        %v486 = vadd.f32 %v484, %v485
        %v487 = vadd.f32 %v474, %v475
        %v488 = vrot.slane %v487, 4
        %v489 = vadd.f32 %v487, %v488
        %v490 = vrot.slane %v489, 2
        %v491 = vadd.f32 %v489, %v490
        %v492 = vrot.slane %v491, 1
        %v493 = vadd.f32 %v491, %v492
        %v494 = vadd.f32 %v476, %v477
        %v495 = vrot.slane %v494, 4
        %v496 = vadd.f32 %v494, %v495
        %v497 = vrot.slane %v496, 2
        %v498 = vadd.f32 %v496, %v497
        %v499 = vrot.slane %v498, 1
        %v500 = vadd.f32 %v498, %v499
        %v501 = vadd.f32 %v478, %v479
        %v502 = vrot.slane %v501, 4
        %v503 = vadd.f32 %v501, %v502
        %v504 = vrot.slane %v503, 2
        %v505 = vadd.f32 %v503, %v504
        %v506 = vrot.slane %v505, 1
        %v507 = vadd.f32 %v505, %v506
        %v508 = vld [vmem:[%s287] sm:$0xf]
        %v510 = vrot.slane %v508, 1
        %v511 = vrot.slane %v508, 2
        %v512 = vrot.slane %v508, 3
        %v517 = vsub.f32 %v486, %v508
        %v518 = vsub.f32 %v493, %v510
        %v519 = vsub.f32 %v500, %v511
        %v520 = vsub.f32 %v507, %v512
        %v521 = vmul.f32 %v517, %v517
        %v522 = vmul.f32 %v518, %v518
        %v523 = vmul.f32 %v519, %v519
        %v524 = vmul.f32 %v520, %v520
        %v529 = vrot.slane %v522, 7
        %vm530 = vcmask 1041409
        %v531 = vsel %vm530, %v529, %v521
        %v532 = vrot.slane %v523, 6
        %vm533 = vcmask 1042434
        %v534 = vsel %vm533, %v532, %v531
        %v535 = vrot.slane %v524, 5
        %vm536 = vcmask 1043459
        %v537 = vsel %vm536, %v535, %v534
        %vm539 = vcmask 1043456
        %v540 = vsel %vm539, %v537, 0.0
        %v541 = vrot.slane %v540, 4
        %v542 = vadd.f32 %v540, %v541
        %v543 = vrot.slane %v542, 2
        %v544 = vadd.f32 %v542, %v543
        %v545 = vrot.slane %v544, 1
        %v546 = vadd.f32 %v544, %v545
        %547 = vst [vmem:[%s262] sm:$0x1] %v546
        %s548 = sand.u32 %s148, 1
        %s549 = scalar_lea.sflag [#allocation3], %s548
        %s550 = sand.u32 %s148, 1
        %s551 = scalar_lea.vmem [#allocation2], %s550
        // Predicated region
        $region37: #{tpu_custom_call.1} parent=35 // pred_check
          %p552 = pneg %p158
        $region38: #{tpu_custom_call.1} parent=35 // pred_check_branch
          %554 = sbr.rel (%p552) target = $region40
        $region39: #{tpu_custom_call.1} parent=35 // pred_region
          %s556 = ssub.s32 16, 16
          %557 = vsyncadd %s549, %s556
          %s558 = smul.addr %s22, 2
          %s559 = sadd.s32 %s23, %s558
          %s560 = smul.addr %s559, 16
          %s561 = scalar_lea.hbm %s4, %s560
          %s563 = sshll.u32 %s551, 4
          %s564 = int_to_ptr.vmem [resolvable:$true] %s563
          %566 = dma.vmem_to_hbm [thread:$0]  %s564, 16, %s561, %s549
        $region40: #{tpu_custom_call.1} parent=35 // pred_fallthru
          _
      $region36: #{tpu_custom_call.1} parent=5 // pred_fallthru
        _
      %p567 = scmp.le.s32.totalorder 2, %s13
      // Predicated region
      $region41: #{tpu_custom_call.1} parent=5 // pred_check
        %p568 = pneg %p567
      $region42: #{tpu_custom_call.1} parent=5 // pred_check_branch
        %570 = sbr.rel (%p568) target = $region44
      $region43: #{tpu_custom_call.1} parent=5 // pred_region
        %s571 = ssub.s32 %s13, 2
        // Predicated region
        $region45: #{tpu_custom_call.1} parent=43 // pred_check
          %p572 = pneg %p164
        $region46: #{tpu_custom_call.1} parent=43 // pred_check_branch
          %574 = sbr.rel (%p572) target = $region48
        $region47: #{tpu_custom_call.1} parent=43 // pred_region
          %s575 = sand.u32 %s149, 1
          %s576 = scalar_lea.sflag [#allocation3], %s575
          %s577 = sand.u32 %s149, 1
          %s578 = scalar_lea.vmem [#allocation2], %s577
          %579 = dma.done %s576, 16
        $region48: #{tpu_custom_call.1} parent=43 // pred_fallthru
          _
      $region44: #{tpu_custom_call.1} parent=5 // pred_fallthru
        _
    $region6: #{tpu_custom_call.1} parent=1 // loop_footer
      %s17 = sadd.s32 1, %s13
    $region7: #{tpu_custom_call.1} parent=1 // loop_footer_branch
      %12 = sbr.rel target = $region3
    $region8: #{tpu_custom_call.1} parent=1 // loop_exit
      _
    %580 = vsyncpa [#allocation3], 1
    %s581 = scalar_lea.sflag [#allocation3], 1
    %582 = vsyncpa %s581, 1

</llo_original>
